<compile_context>
chip_gen: v7x
topology: tpu7x:2x2x1
jax: 0.10.0
libtpu: 0.0.40
codegen_flags: <defaults>
</compile_context>

<pallas_src>
import math

import jax
import jax.numpy as jnp
from jax.experimental import pallas as pl
from jax.experimental.pallas import tpu as pltpu


def _att_row0_kernel(v_ref, l_ref, out_ref):
    """Grid = (batch tiles, N tiles); output block resident across the N axis.

    v_ref  : (bt, C_in)      query-row vectors  l1[:, :, 0] @ (Wq^T Wk / sqrt(C_out))
    l_ref  : (bt, C_in, nt)  streamed point-feature tile
    out_ref: (bt, N)         attention row (lane-dense), accumulated then softmaxed
    """
    k = pl.program_id(1)
    nt = l_ref.shape[2]
    n_full = out_ref.shape[1]

    v = v_ref[...].astype(jnp.float32)                   # (bt, C_in)
    l = l_ref[...].astype(jnp.float32)                   # (bt, C_in, nt)
    # energy row 0 for this N tile: contract the tiny C_in axis on the VPU
    # (sublane reduction); the MXU would be badly underfilled at C_in this small.
    row = jnp.sum(v[:, :, None] * l, axis=1)             # (bt, nt)

    if nt == n_full:
        out_ref[...] = row                                # single-tile fast path
    else:
        start = pl.multiple_of(k * nt, nt)                # nt is a multiple of 128
        out_ref[:, pl.ds(start, nt)] = row                # aligned, unmasked stores

    # Last N tile: full-row numerically-stable softmax in place on the
    # VMEM-resident output block.  Exact: softmax rows are independent, so this
    # equals softmaxing the full N x N attention matrix and slicing row 0.
    @pl.when(k == pl.num_programs(1) - 1)
    def _():
        full = out_ref[...]
        mx = jnp.max(full, axis=-1, keepdims=True)
        e = jnp.exp(full - mx)
        s = jnp.sum(e, axis=-1, keepdims=True)
        # EUP reciprocal: separate VLIW slot from the VPU exp/mul work; a
        # per-row positive scale cannot change the downstream top-k ordering.
        out_ref[...] = e * pl.reciprocal(s, approx=True)


def _pick_tiles(B, C_in, N, itemsize, vmem_budget=32 * 1024 * 1024):
    """Choose (batch_tile, n_tile) dividing (B, N) that fit a VMEM budget."""
    # N tile: keep the full N when small or when it doesn't split into
    # 128-lane multiples; otherwise stream 128-aligned chunks.
    nt = N
    if N > 4096 and N % 128 == 0:
        for cand in (2048, 1024, 512, 256, 128):
            if N % cand == 0:
                nt = cand
                break

    def fits(bt):
        l1_tiles = 2 * bt * C_in * max(nt, 128) * itemsize   # double-buffered input
        out_row = bt * max(N, 128) * 4                        # VMEM-resident output
        v_tiles = 2 * bt * max(C_in, 128) * 4
        return l1_tiles + out_row + v_tiles <= vmem_budget

    # Prefer sublane-aligned batch tiles dividing B (amortize per-step
    # overhead); block dim == full array dim is always layout-legal.
    cands = sorted({bt for bt in (256, 128, 64, 32, 16, 8) if B % bt == 0} | {B},
                   reverse=True)
    for bt in cands:
        if fits(bt):
            return bt, nt
    return cands[-1], nt   # nothing fits comfortably; take the smallest legal tile


def im_choose_forward(l1, xyz1, wq, wk, top_k):
    B, C_in, N = l1.shape
    C_out = wq.shape[0]

    # Hoisted tiny precompute (done once, outside the streaming kernel):
    #   M = Wq^T Wk with the 1/sqrt(C_out) scale folded in, and V = L0 @ M.
    M = jnp.dot(wq.T.astype(jnp.float32), wk.astype(jnp.float32),
                preferred_element_type=jnp.float32) * (1.0 / math.sqrt(C_out))
    V = jnp.dot(l1[:, :, 0].astype(jnp.float32), M,
                preferred_element_type=jnp.float32)                   # (B, C_in)

    bt, nt = _pick_tiles(B, C_in, N, jnp.dtype(l1.dtype).itemsize)
    att_se = pl.pallas_call(
        _att_row0_kernel,
        out_shape=jax.ShapeDtypeStruct((B, N), jnp.float32),
        grid=(B // bt, N // nt),
        in_specs=[
            pl.BlockSpec((bt, C_in), lambda i, k: (i, 0)),
            pl.BlockSpec((bt, C_in, nt), lambda i, k: (i, 0, k)),
        ],
        out_specs=pl.BlockSpec((bt, N), lambda i, k: (i, 0)),
        compiler_params=pltpu.CompilerParams(
            # batch axis shards across TCs on v7x; N axis revisits the output
            # block (accumulator pattern) so it must stay "arbitrary".
            dimension_semantics=("parallel", "arbitrary"),
            vmem_limit_bytes=64 * 1024 * 1024,
        ),
    )(V, l1)                                                          # (B, N)

    # TODO(synk): top-k selection + gather kept as plain-JAX glue (no clean
    # Pallas TPU top-k); fuse via PrefetchScalarGridSpec only if this op is hot.
    _, topk_idx = jax.lax.top_k(att_se, top_k)                        # (B, top_k)
    l1_new = jnp.take_along_axis(l1, topk_idx[:, None, :], axis=-1)   # (B, C_in, top_k)
    p1_new = jnp.take_along_axis(xyz1, topk_idx[:, None, :], axis=-1) # (B, 3, top_k)
    return l1_new.transpose(0, 2, 1), p1_new.transpose(0, 2, 1)


def _reference_forward(l1, xyz1, wq, wk, top_k):
    # Full N x N reference path, matching the PyTorch module exactly.
    q = jnp.einsum("oc,bcn->bon", wq, l1)
    k = jnp.einsum("oc,bcn->bon", wk, l1)
    energy = jnp.einsum("bcn,bcm->bnm", q, k)
    att = jax.nn.softmax(energy / math.sqrt(q.shape[1]), axis=-1)
    att_se = att[:, 0, :]
    _, idx = jax.lax.top_k(att_se, top_k)
    l1_new = jnp.take_along_axis(l1, idx[:, None, :], axis=-1)
    p1_new = jnp.take_along_axis(xyz1, idx[:, None, :], axis=-1)
    return l1_new.transpose(0, 2, 1), p1_new.transpose(0, 2, 1)


if __name__ == "__main__":
    B, C_in, C_out, N, TOP_K = 2, 8, 32, 16, 8

    key = jax.random.PRNGKey(0)
    k_l1, k_xyz, k_wq, k_wk = jax.random.split(key, 4)
    l1 = jax.random.normal(k_l1, (B, C_in, N), jnp.float32)
    xyz1 = jax.random.normal(k_xyz, (B, 3, N), jnp.float32)
    # deterministic synthetic Conv1d weights (out, in), bias=False
    wq = jax.random.normal(k_wq, (C_out, C_in), jnp.float32) * 0.1
    wk = jax.random.normal(k_wk, (C_out, C_in), jnp.float32) * 0.1

    l1_new, p1_new = im_choose_forward(l1, xyz1, wq, wk, TOP_K)
    jax.block_until_ready((l1_new, p1_new))

    ref_l, ref_p = _reference_forward(l1, xyz1, wq, wk, TOP_K)
    assert l1_new.shape == (B, TOP_K, C_in) and p1_new.shape == (B, TOP_K, 3)
    assert jnp.allclose(l1_new, ref_l, atol=1e-5), "feature gather mismatch"
    assert jnp.allclose(p1_new, ref_p, atol=1e-5), "position gather mismatch"

    print("KERNEL_OK")
</pallas_src>

<mosaic_0001>
module attributes {stable_mosaic.version = 11 : i64} {
  func.func @_att_row0_kernel(%arg0: i32, %arg1: i32, %arg2: memref<2x8xf32, #tpu.memory_space<vmem>>, %arg3: memref<2x8x16xf32, #tpu.memory_space<vmem>>, %arg4: memref<2x16xf32, #tpu.memory_space<vmem>>) attributes {dimension_semantics = [#tpu.dimension_semantics<parallel>, #tpu.dimension_semantics<arbitrary>], iteration_bounds = array<i64: 1, 1>, scalar_prefetch = 0 : i64, scratch_operands = 0 : i64, tpu.core_type = #tpu.core_type<tc>, window_params = [{transform_indices = @transform_0, window_bounds = array<i64: 2, 8>}, {transform_indices = @transform_1, window_bounds = array<i64: 2, 8, 16>}, {transform_indices = @transform_2, window_bounds = array<i64: 2, 16>}]} {
    %c0 = arith.constant 0 : index
    %c0_0 = arith.constant 0 : index
    %0 = vector.load %arg2[%c0, %c0_0] : memref<2x8xf32, #tpu.memory_space<vmem>>, vector<2x8xf32>
    %c0_1 = arith.constant 0 : index
    %c0_2 = arith.constant 0 : index
    %c0_3 = arith.constant 0 : index
    %1 = vector.load %arg3[%c0_1, %c0_2, %c0_3] : memref<2x8x16xf32, #tpu.memory_space<vmem>>, vector<2x8x16xf32>
    %2 = vector.shape_cast %0 : vector<2x8xf32> to vector<2x8x1xf32>
    %3 = vector.broadcast %2 : vector<2x8x1xf32> to vector<2x8x16xf32>
    %4 = arith.mulf %3, %1 : vector<2x8x16xf32>
    %cst = arith.constant dense<0.000000e+00> : vector<2x16xf32>
    %5 = vector.multi_reduction <add>, %4, %cst [1] : vector<2x8x16xf32> to vector<2x16xf32>
    %c0_4 = arith.constant 0 : index
    %c0_5 = arith.constant 0 : index
    %6 = vector.load %arg4[%c0_4, %c0_5] : memref<2x16xf32, #tpu.memory_space<vmem>>, vector<2x16xf32>
    tpu.vector_store %arg4[%c0_4, %c0_5], %5 {strides = array<i32>} : memref<2x16xf32, #tpu.memory_space<vmem>>, vector<2x16xf32>,
    %c0_i32 = arith.constant 0 : i32
    %7 = arith.cmpi eq, %arg1, %c0_i32 : i32
    %8 = arith.extui %7 : i1 to i32
    %c0_i32_6 = arith.constant 0 : i32
    %9 = arith.cmpi ne, %8, %c0_i32_6 : i32
    scf.if %9 {
      %c0_7 = arith.constant 0 : index
      %c0_8 = arith.constant 0 : index
      %10 = vector.load %arg4[%c0_7, %c0_8] : memref<2x16xf32, #tpu.memory_space<vmem>>, vector<2x16xf32>
      %cst_9 = arith.constant dense<0xFF800000> : vector<2xf32>
      %11 = vector.multi_reduction <maximumf>, %10, %cst_9 [1] : vector<2x16xf32> to vector<2xf32>
      %12 = vector.shape_cast %11 : vector<2xf32> to vector<2x1xf32>
      %13 = vector.broadcast %12 : vector<2x1xf32> to vector<2x16xf32>
      %14 = arith.subf %10, %13 : vector<2x16xf32>
      %15 = math.exp %14 : vector<2x16xf32>
      %cst_10 = arith.constant dense<0.000000e+00> : vector<2xf32>
      %16 = vector.multi_reduction <add>, %15, %cst_10 [1] : vector<2x16xf32> to vector<2xf32>
      %17 = vector.shape_cast %16 : vector<2xf32> to vector<2x1xf32>
      %18 = tpu.reciprocal %17 {approx = true} : vector<2x1xf32> -> vector<2x1xf32>
      %19 = vector.broadcast %18 : vector<2x1xf32> to vector<2x16xf32>
      %20 = arith.mulf %15, %19 : vector<2x16xf32>
      %c0_11 = arith.constant 0 : index
      %c0_12 = arith.constant 0 : index
      %21 = vector.load %arg4[%c0_11, %c0_12] : memref<2x16xf32, #tpu.memory_space<vmem>>, vector<2x16xf32>
      tpu.vector_store %arg4[%c0_11, %c0_12], %20 {strides = array<i32>} : memref<2x16xf32, #tpu.memory_space<vmem>>, vector<2x16xf32>,
    } else {
    }
    return
  }
  func.func @transform_0(%arg0: i32, %arg1: i32) -> (i32, i32) {
    %c0_i32 = arith.constant 0 : i32
    %c0_i32_0 = arith.constant 0 : i32
    return %arg0, %c0_i32 : i32, i32
  }
  func.func @transform_1(%arg0: i32, %arg1: i32) -> (i32, i32, i32) {
    %c0_i32 = arith.constant 0 : i32
    %c0_i32_0 = arith.constant 0 : i32
    return %arg0, %c0_i32, %arg1 : i32, i32, i32
  }
  func.func @transform_2(%arg0: i32, %arg1: i32) -> (i32, i32) {
    %c0_i32 = arith.constant 0 : i32
    %c0_i32_0 = arith.constant 0 : i32
    return %arg0, %c0_i32 : i32, i32
  }
}

</mosaic_0001>

<llo_original>
// kernel: tpu_custom_call.1
$region0: #{tpu_custom_call.1}
  #allocation0 [shape = 'u32[]', space=smem, size = 0x4, offset = 0x4, fixed_abs, tag = 'smem constant byte address 0x4 - core index']
  #allocation1 [shape = 'u32[144,128]{1,0:T(1,128)}', space=vmem, size = 0x12000, scoped, tag = 'internal scratch']
  %s0 = inlined_call_operand.hbm [shape: f32[2,8], index: 0, kind: input, shape index: {}]
  %s1 = inlined_call_operand.hbm [shape: f32[2,8,16], index: 1, kind: input, shape index: {}]
  %s2 = inlined_call_operand.hbm [shape: f32[2,16], index: 2, kind: output, shape index: {}]
  %s3 = sld [smem:[#allocation0]]
  $region30: #{tpu_custom_call.1} parent=0
    _
  %s5 = ssub.s32 1, %s3
  %s6 = scalar_select 0, %s5, %s3
  $region1: #{tpu_custom_call.1} parent=0
    #allocation2 [shape = 'u8[1024]{0}', space=vmem, size = 0x400, scoped, tag = 'input window, operand 0, single buffered']
    #allocation3 [shape = 's32[1]{0}', space=sflag, size = 0x4, scoped, tag = 'scoped memory for tpu_custom_call.1']
    #allocation4 [shape = 's32[1]{0}', space=sflag, size = 0x4, scoped, tag = 'scoped memory for tpu_custom_call.1']
    #allocation5 [shape = 'u8[8192]{0}', space=vmem, size = 0x2000, scoped, tag = 'input window, operand 1, single buffered']
    #allocation6 [shape = 's32[1]{0}', space=sflag, size = 0x4, scoped, tag = 'scoped memory for tpu_custom_call.1']
    #allocation7 [shape = 'u8[1024]{0}', space=vmem, size = 0x400, scoped, tag = 'output window, operand 0, single buffered']
    %7 = vsyncpa [#allocation3], 0
    %8 = vsyncpa [#allocation6], 0
    %9 = vsyncpa [#allocation4], 0
    // Predicated region
    $region2: #{tpu_custom_call.1} parent=1 // pred_check
      _
    $region3: #{tpu_custom_call.1} parent=1 // pred_check_branch
      %11 = sbr.rel (0) target = $region5
    $region4: #{tpu_custom_call.1} parent=1 // pred_region
      %s13 = ssub.s32 32, 32
      %14 = vsyncadd [#allocation3], %s13
      %s16 = sshll.u32 [#allocation2], 4
      %s17 = int_to_ptr.vmem [resolvable:$true] %s16
      %19 = dma.hbm_to_vmem [thread:$0]  %s0, 32, %s17, [#allocation3]
    $region5: #{tpu_custom_call.1} parent=1 // pred_fallthru
      _
    // Predicated region
    $region6: #{tpu_custom_call.1} parent=1 // pred_check
      _
    $region7: #{tpu_custom_call.1} parent=1 // pred_check_branch
      %21 = sbr.rel (0) target = $region9
    $region8: #{tpu_custom_call.1} parent=1 // pred_region
      %s23 = ssub.s32 256, 256
      %24 = vsyncadd [#allocation6], %s23
      %s25 = sshll.u32 [#allocation5], 4
      %s26 = int_to_ptr.vmem [resolvable:$true] %s25
      %31 = dma.hbm_to_vmem [thread:$0]  %s1, 256, %s26, [#allocation6], 128, 128, 8
    $region9: #{tpu_custom_call.1} parent=1 // pred_fallthru
      _
    // Predicated region
    $region10: #{tpu_custom_call.1} parent=1 // pred_check
      _
    $region11: #{tpu_custom_call.1} parent=1 // pred_check_branch
      %33 = sbr.rel (0) target = $region13
    $region12: #{tpu_custom_call.1} parent=1 // pred_region
      %34 = dma.done [#allocation3], 32
    $region13: #{tpu_custom_call.1} parent=1 // pred_fallthru
      _
    // Predicated region
    $region14: #{tpu_custom_call.1} parent=1 // pred_check
      _
    $region15: #{tpu_custom_call.1} parent=1 // pred_check_branch
      %36 = sbr.rel (0) target = $region17
    $region16: #{tpu_custom_call.1} parent=1 // pred_region
      %37 = dma.done [#allocation6], 256
    $region17: #{tpu_custom_call.1} parent=1 // pred_fallthru
      _
    %v38 = vld [vmem:[#allocation2] sm:$0x3]
    %v39 = vld [vmem:[#allocation5] sm:$0xff]
    %v40 = vld [vmem:[#allocation5 + $0x8] sm:$0xff]
    %v41 = vlaneseq
    %v42 = vshrl.u32 %v41, 7
    %v43 = vsub.s32 0, %v42
    %v44 = vrot.slane %v38, %v43
    %46 = vbcast.lane.b32.xlu0 %v44, 256
    %v47 = vpop.permute.xlu0 %46
    %v48 = vlaneseq
    %v49 = vshrl.u32 %v48, 7
    %v50 = vsub.s32 1, %v49
    %v51 = vrot.slane %v38, %v50
    %53 = vbcast.lane.b32.xlu0 %v51, 256
    %v54 = vpop.permute.xlu0 %53
    %v55 = vmul.f32 %v47, %v39
    %v56 = vmul.f32 %v54, %v40
    %vm57 = vcmask 130048
    %v58 = vsel %vm57, %v55, 0.0
    %v59 = vrot.slane %v58, 4
    %v60 = vadd.f32 %v58, %v59
    %v61 = vrot.slane %v60, 2
    %v62 = vadd.f32 %v60, %v61
    %v63 = vrot.slane %v62, 1
    %v64 = vadd.f32 %v62, %v63
    %v65 = vsel %vm57, %v56, 0.0
    %v66 = vrot.slane %v65, 4
    %v67 = vadd.f32 %v65, %v66
    %v68 = vrot.slane %v67, 2
    %v69 = vadd.f32 %v67, %v68
    %v70 = vrot.slane %v69, 1
    %v71 = vadd.f32 %v69, %v70
    %vm74 = vcmask 1041409
    %v75 = vsel %vm74, %v71, %v64
    %vm77 = vcmask 123904
    %78 = vst.msk [vmem:[#allocation7] sm:$0x3] %vm77, %v75
    %p79 = scmp.eq.s32.totalorder 0, 0
    // Predicated region
    $region18: #{tpu_custom_call.1} parent=1 // pred_check
      %p80 = pneg %p79
    $region19: #{tpu_custom_call.1} parent=1 // pred_check_branch
      %82 = sbr.rel (%p80) target = $region21
    $region20: #{tpu_custom_call.1} parent=1 // pred_region
      %v83 = vld [vmem:[#allocation7] sm:$0x3]
      %v84 = vsel %vm77, %v83, -inf
      %85 = vmax.xlane.f32.xlu0 %v84
      %v86 = vpop.xlane.xlu0 %85
      %v87 = vsub.f32 %v83, %v86
      %v88 = vmul.f32 %v87, 1.442695
      %v89 = vpow.pop %v88
      %v90 = vsel %vm77, %v89, 0.0
      %91 = vadd.xlane.f32.xlu0 %v90
      %v92 = vpop.xlane.xlu0 %91
      %v93 = vrcp.pop %v92
      %v94 = vmul.f32 %v89, %v93
      %95 = vst.msk [vmem:[#allocation7] sm:$0x3] %vm77, %v94
    $region21: #{tpu_custom_call.1} parent=1 // pred_fallthru
      _
    // Predicated region
    $region22: #{tpu_custom_call.1} parent=1 // pred_check
      _
    $region23: #{tpu_custom_call.1} parent=1 // pred_check_branch
      %97 = sbr.rel (0) target = $region25
    $region24: #{tpu_custom_call.1} parent=1 // pred_region
      %s99 = ssub.s32 32, 32
      %100 = vsyncadd [#allocation4], %s99
      %s102 = sshll.u32 [#allocation7], 4
      %s103 = int_to_ptr.vmem [resolvable:$true] %s102
      %105 = dma.vmem_to_hbm [thread:$0]  %s103, 32, %s2, [#allocation4]
    $region25: #{tpu_custom_call.1} parent=1 // pred_fallthru
      _
    // Predicated region
    $region26: #{tpu_custom_call.1} parent=1 // pred_check
      _
    $region27: #{tpu_custom_call.1} parent=1 // pred_check_branch
      %107 = sbr.rel (0) target = $region29
    $region28: #{tpu_custom_call.1} parent=1 // pred_region
      %108 = dma.done [#allocation4], 32
    $region29: #{tpu_custom_call.1} parent=1 // pred_fallthru
      _
    %109 = vsyncpa [#allocation3], 1
    %110 = vsyncpa [#allocation6], 1
    %111 = vsyncpa [#allocation4], 1

</llo_original>
